<compile_context>
chip_gen: v7x
topology: tpu7x:2x2x1
jax: 0.10.0
libtpu: 0.0.40
codegen_flags: <defaults>
</compile_context>

<pallas_src>
import math
import functools

import jax
import jax.numpy as jnp
from jax.experimental import pallas as pl
from jax.experimental.pallas import tpu as pltpu


def _round_up(x, m):
    return ((x + m - 1) // m) * m


def _cdiv(a, b):
    return -(-a // b)


def _ent_kernel(x_ref, out_ref, *, inv_log_hw):
    # x_ref: (TR, L) block in its native dtype; out_ref: (TR, 1) f32 entropy.
    xn = x_ref[...]
    # Max in the native dtype (exact for bf16/int8); cast folded into the
    # subtraction so no full-tile f32 copy stays live across the reduction.
    m = jnp.max(xn, axis=-1, keepdims=True).astype(jnp.float32)
    s = xn.astype(jnp.float32) - m
    e = jnp.exp(s)                                      # EUP
    z = jnp.sum(e, axis=-1, keepdims=True)              # (TR, 1)
    es = jnp.sum(e * s, axis=-1, keepdims=True)         # (TR, 1)
    # -sum(p * logp) == logZ - sum(e*s)/Z (no per-element p / logp temporaries).
    ent = jnp.log(z) - es / z
    # TODO(synk): lane-dense (1, TR) output would avoid masked vst.msk stores,
    # but the (TR,1)->(1,TR) relayout is a risky Mosaic transpose for arbitrary
    # TR and output traffic is L x smaller than input, so keep the column.
    out_ref[...] = ent * inv_log_hw


def _usable_vmem_bytes():
    """Per-generation VMEM budget (75% of capacity, clamped to sane bounds)."""
    try:
        cap = int(pltpu.get_tpu_info().vmem_capacity_bytes)
    except Exception:
        cap = 64 << 20          # conservative: v7x per-TensorCore VMEM
    usable = (3 * cap) // 4     # 48 MiB on v7x, 96 MiB on v5e/v6e
    return max(16 << 20, min(usable, 96 << 20))


def _choose_row_tile(rows, L, itemsize, usable_vmem):
    """Largest sublane-aligned row tile whose pipelined footprint fits VMEM."""
    packing = max(1, 4 // int(itemsize))
    sublane = 8 * packing                      # 8 (f32), 16 (bf16), 32 (int8/fp8)
    row_native = L * int(itemsize)             # bytes of one input row
    # Per tile row: 2x double-buffered native input block + ~3 f32 row-sized
    # in-kernel temporaries (s, e, fused e*s).
    vmem_per_row = 2 * row_native + 3 * L * 4

    def _floor_rows(nbytes, per_row):
        return (nbytes // per_row) // sublane * sublane

    # TODO(synk): for very large L (row footprint of several MiB) the minimum
    # one-sublane tile can exceed VMEM; chunk the lane axis (online softmax
    # over L) instead of relying on tr flooring at `sublane`.
    tr_fit = max(sublane, _floor_rows(usable_vmem, vmem_per_row))
    tr_target = max(sublane, _floor_rows(4 << 20, row_native))   # ~4 MiB blocks
    tr_min = max(sublane, _floor_rows(512 << 10, row_native))    # >= ~512 KiB
    tr = min(tr_fit, tr_target)
    tr_min = min(tr_min, tr)

    # If everything fits in < 4 blocks, split into ~4 grid steps (>= 2 per
    # TensorCore on dual-TC chips) while keeping each block >= ~512 KiB.
    if _cdiv(rows, tr) < 4:
        tr_quarter = _round_up(max(1, _cdiv(rows, 4)), sublane)
        tr = max(tr_min, min(tr, tr_quarter))
    if tr >= rows:
        tr = rows              # single block == full array dims (always legal)
    return tr


def ent_loss(x, threshold=-1, reduction="mean"):
    """x: (n, c, h, w). Returns scalar ('mean' / threshold>0) or (n,) ('none')."""
    n, c, h, w = x.shape
    rows, L = n * c, h * w
    x2d = x.reshape(rows, L)                   # native dtype; cast in-kernel
    itemsize = jnp.dtype(x.dtype).itemsize

    usable_vmem = _usable_vmem_bytes()
    tr = _choose_row_tile(rows, L, itemsize, usable_vmem)
    grid = (_cdiv(rows, tr),)

    # h*w == 1: log(1) == 0 -> inf scale; 0 * inf = nan, matching the
    # reference's 0/0 = nan instead of a Python ZeroDivisionError.
    log_hw = math.log(L)
    inv_log_hw = (1.0 / log_hw) if log_hw > 0.0 else float("inf")

    ent_rows = pl.pallas_call(
        functools.partial(_ent_kernel, inv_log_hw=inv_log_hw),
        out_shape=jax.ShapeDtypeStruct((rows, 1), jnp.float32),
        grid_spec=pltpu.PrefetchScalarGridSpec(
            num_scalar_prefetch=0,
            grid=grid,
            in_specs=[pl.BlockSpec((tr, L), lambda i: (i, 0))],
            out_specs=pl.BlockSpec((tr, 1), lambda i: (i, 0)),
        ),
        compiler_params=pltpu.CompilerParams(
            dimension_semantics=("parallel",),
            vmem_limit_bytes=int(usable_vmem),
        ),
        cost_estimate=pl.CostEstimate(
            flops=6 * rows * L,
            transcendentals=rows * L + rows,
            bytes_accessed=rows * L * int(itemsize) + rows * 4,
        ),
    )(x2d)

    ent = ent_rows.reshape(n, c)               # per-(n, c) normalized entropy
    if threshold > 0:
        # PyTorch: ent = ent[ent < threshold]; both reductions then collapse
        # the 1-D selection to a scalar mean (nan if nothing selected).
        mask = ent < threshold
        return jnp.sum(jnp.where(mask, ent, 0.0)) / jnp.sum(mask)
    if reduction == "mean":
        return jnp.mean(ent)
    elif reduction == "none":
        return jnp.mean(ent, axis=-1)
    else:
        raise ValueError(f"unknown reduction: {reduction}")


def _ref_ent_loss(x, threshold=-1, reduction="mean"):
    # Pure-JAX reference mirroring the PyTorch forward.
    n, c, h, w = x.shape
    xr = x.reshape(n, c, -1).astype(jnp.float32)
    logp = jax.nn.log_softmax(xr, axis=2)
    p = jnp.exp(logp)
    ent = -jnp.sum(p * logp, axis=2) / math.log(h * w)
    if threshold > 0:
        mask = ent < threshold
        return jnp.sum(jnp.where(mask, ent, 0.0)) / jnp.sum(mask)
    if reduction == "mean":
        return jnp.mean(ent)
    return jnp.mean(ent, axis=-1)


if __name__ == "__main__":
    key = jax.random.PRNGKey(0)
    k0, k1 = jax.random.split(key)

    # Small primary test: (2, 4, 16, 16) f32.
    n, c, h, w = 2, 4, 16, 16
    x = jax.random.normal(k0, (n, c, h, w), dtype=jnp.float32)

    out = jax.block_until_ready(ent_loss(x, reduction="mean"))
    ref = jax.block_until_ready(_ref_ent_loss(x, reduction="mean"))
    assert jnp.allclose(out, ref, rtol=1e-5, atol=1e-5), (out, ref)

    out_none = jax.block_until_ready(ent_loss(x, reduction="none"))
    ref_none = jax.block_until_ready(_ref_ent_loss(x, reduction="none"))
    assert jnp.allclose(out_none, ref_none, rtol=1e-5, atol=1e-5)

    # threshold > 0 selection path (2.0 keeps every row: normalized ent <= 1).
    out_thr = jax.block_until_ready(ent_loss(x, threshold=2.0, reduction="mean"))
    ref_thr = jax.block_until_ready(_ref_ent_loss(x, threshold=2.0, reduction="mean"))
    assert jnp.allclose(out_thr, ref_thr, rtol=1e-5, atol=1e-5), (out_thr, ref_thr)

    # Native-dtype (bf16) DMA path: cast to f32 happens inside the kernel.
    xb = x.astype(jnp.bfloat16)
    out_b = jax.block_until_ready(ent_loss(xb, reduction="mean"))
    ref_b = jax.block_until_ready(_ref_ent_loss(xb, reduction="mean"))
    assert jnp.allclose(out_b, ref_b, rtol=1e-4, atol=1e-4), (out_b, ref_b)

    # Multi-step grid with a ragged (masked) last block: rows = 4*33 = 132.
    n2, c2, h2, w2 = 4, 33, 32, 32
    x2 = jax.random.normal(k1, (n2, c2, h2, w2), dtype=jnp.float32)
    out2 = jax.block_until_ready(ent_loss(x2, reduction="none"))
    ref2 = jax.block_until_ready(_ref_ent_loss(x2, reduction="none"))
    assert jnp.allclose(out2, ref2, rtol=1e-5, atol=1e-5)

    print("KERNEL_OK")
</pallas_src>

<mosaic_0001>
module attributes {stable_mosaic.version = 11 : i64} {
  func.func @_ent_kernel(%arg0: i32, %arg1: memref<8x256xf32, #tpu.memory_space<vmem>>, %arg2: memref<8x1xf32, #tpu.memory_space<vmem>>) attributes {dimension_semantics = [#tpu.dimension_semantics<parallel>], iteration_bounds = array<i64: 1>, scalar_prefetch = 0 : i64, scratch_operands = 0 : i64, tpu.core_type = #tpu.core_type<tc>, window_params = [{transform_indices = @transform_0, window_bounds = array<i64: 8, 256>}, {transform_indices = @transform_1, window_bounds = array<i64: 8, 1>}]} {
    %c0 = arith.constant 0 : index
    %c0_0 = arith.constant 0 : index
    %0 = vector.load %arg1[%c0, %c0_0] : memref<8x256xf32, #tpu.memory_space<vmem>>, vector<8x256xf32>
    %cst = arith.constant dense<0xFF800000> : vector<8xf32>
    %1 = vector.multi_reduction <maximumf>, %0, %cst [1] : vector<8x256xf32> to vector<8xf32>
    %2 = vector.shape_cast %1 : vector<8xf32> to vector<8x1xf32>
    %3 = vector.broadcast %2 : vector<8x1xf32> to vector<8x256xf32>
    %4 = arith.subf %0, %3 : vector<8x256xf32>
    %5 = math.exp %4 : vector<8x256xf32>
    %cst_1 = arith.constant dense<0.000000e+00> : vector<8xf32>
    %6 = vector.multi_reduction <add>, %5, %cst_1 [1] : vector<8x256xf32> to vector<8xf32>
    %7 = vector.shape_cast %6 : vector<8xf32> to vector<8x1xf32>
    %8 = arith.mulf %5, %4 : vector<8x256xf32>
    %cst_2 = arith.constant dense<0.000000e+00> : vector<8xf32>
    %9 = vector.multi_reduction <add>, %8, %cst_2 [1] : vector<8x256xf32> to vector<8xf32>
    %10 = vector.shape_cast %9 : vector<8xf32> to vector<8x1xf32>
    %11 = math.log %7 : vector<8x1xf32>
    %12 = arith.divf %10, %7 : vector<8x1xf32>
    %13 = arith.subf %11, %12 : vector<8x1xf32>
    %cst_3 = arith.constant 0.180336878 : f32
    %14 = vector.broadcast %cst_3 : f32 to vector<8x1xf32>
    %15 = arith.mulf %13, %14 : vector<8x1xf32>
    %c0_4 = arith.constant 0 : index
    %c0_5 = arith.constant 0 : index
    %16 = vector.load %arg2[%c0_4, %c0_5] : memref<8x1xf32, #tpu.memory_space<vmem>>, vector<8x1xf32>
    tpu.vector_store %arg2[%c0_4, %c0_5], %15 {strides = array<i32>} : memref<8x1xf32, #tpu.memory_space<vmem>>, vector<8x1xf32>,
    return
  }
  func.func @transform_0(%arg0: i32) -> (i32, i32) {
    %c0_i32 = arith.constant 0 : i32
    %c0_i32_0 = arith.constant 0 : i32
    return %arg0, %c0_i32 : i32, i32
  }
  func.func @transform_1(%arg0: i32) -> (i32, i32) {
    %c0_i32 = arith.constant 0 : i32
    %c0_i32_0 = arith.constant 0 : i32
    return %arg0, %c0_i32 : i32, i32
  }
}

</mosaic_0001>

<llo_original>
// kernel: tpu_custom_call.1
$region0: #{tpu_custom_call.1}
  #allocation0 [shape = 'u32[]', space=smem, size = 0x4, offset = 0x4, fixed_abs, tag = 'smem constant byte address 0x4 - core index']
  #allocation1 [shape = 'u32[144,128]{1,0:T(1,128)}', space=vmem, size = 0x12000, scoped, tag = 'internal scratch']
  %s0 = inlined_call_operand.hbm [shape: f32[8,256], index: 0, kind: input, shape index: {}]
  %s1 = inlined_call_operand.vmem [shape: f32[8,1], index: 1, kind: output, shape index: {}]
  %s2 = sld [smem:[#allocation0]]
  $region18: #{tpu_custom_call.1} parent=0
    _
  %s4 = ssub.s32 1, %s2
  %s5 = scalar_select 0, %s4, %s2
  $region1: #{tpu_custom_call.1} parent=0
    #allocation2 [shape = 'u8[8192]{0}', space=vmem, size = 0x2000, scoped, tag = 'input window, operand 0, single buffered']
    #allocation3 [shape = 's32[1]{0}', space=sflag, size = 0x4, scoped, tag = 'scoped memory for tpu_custom_call.1']
    %6 = vsyncpa [#allocation3], 0
    // Predicated region
    $region2: #{tpu_custom_call.1} parent=1 // pred_check
      _
    $region3: #{tpu_custom_call.1} parent=1 // pred_check_branch
      %8 = sbr.rel (0) target = $region5
    $region4: #{tpu_custom_call.1} parent=1 // pred_region
      %s10 = ssub.s32 256, 256
      %11 = vsyncadd [#allocation3], %s10
      %s13 = sshll.u32 [#allocation2], 4
      %s14 = int_to_ptr.vmem [resolvable:$true] %s13
      %16 = dma.hbm_to_vmem [thread:$0]  %s0, 256, %s14, [#allocation3]
    $region5: #{tpu_custom_call.1} parent=1 // pred_fallthru
      _
    // Predicated region
    $region6: #{tpu_custom_call.1} parent=1 // pred_check
      _
    $region7: #{tpu_custom_call.1} parent=1 // pred_check_branch
      %18 = sbr.rel (0) target = $region9
    $region8: #{tpu_custom_call.1} parent=1 // pred_region
      %19 = dma.done [#allocation3], 256
    $region9: #{tpu_custom_call.1} parent=1 // pred_fallthru
      _
    %v20 = vld [vmem:[#allocation2] sm:$0xff]
    %v21 = vld [vmem:[#allocation2 + $0x8] sm:$0xff]
    %v22 = vmax.f32 %v20, %v21
    %23 = vmax.xlane.f32.xlu0 %v22
    %v24 = vpop.xlane.xlu0 %23
    %v25 = vsub.f32 %v20, %v24
    %v26 = vsub.f32 %v21, %v24
    %v27 = vmul.f32 %v25, 1.442695
    %v28 = vpow.pop %v27
    %v29 = vmul.f32 %v26, 1.442695
    %v30 = vpow.pop %v29
    %v31 = vadd.f32 %v28, %v30
    %32 = vadd.xlane.f32.xlu0 %v31
    %v33 = vpop.xlane.xlu0 %32
    %v34 = vmul.f32 %v28, %v25
    %v35 = vmul.f32 %v30, %v26
    %v36 = vadd.f32 %v34, %v35
    %37 = vadd.xlane.f32.xlu0 %v36
    %v38 = vpop.xlane.xlu0 %37
    %v39 = vlog2.pop %v33
    %v40 = vmul.f32 %v39, 0.6931472
    %v41 = vrcp.pop %v33
    %v42 = vmul.f32 %v38, %v41
    %v43 = vsub.f32 %v40, %v42
    %v44 = vmul.f32 %v43, 0.18033688
    %vm45 = vcmask 7168
    %46 = vst.msk [vmem:[%s1] sm:$0xff] %vm45, %v44
    // Predicated region
    $region10: #{tpu_custom_call.1} parent=1 // pred_check
      _
    $region11: #{tpu_custom_call.1} parent=1 // pred_check_branch
      %48 = sbr.rel (0) target = $region13
    $region12: #{tpu_custom_call.1} parent=1 // pred_region
      _
    $region13: #{tpu_custom_call.1} parent=1 // pred_fallthru
      _
    // Predicated region
    $region14: #{tpu_custom_call.1} parent=1 // pred_check
      _
    $region15: #{tpu_custom_call.1} parent=1 // pred_check_branch
      %50 = sbr.rel (0) target = $region17
    $region16: #{tpu_custom_call.1} parent=1 // pred_region
      _
    $region17: #{tpu_custom_call.1} parent=1 // pred_fallthru
      _
    %51 = vsyncpa [#allocation3], 1

</llo_original>
